<compile_context>
chip_gen: v5e
topology: v5e:2x2
jax: 0.10.0
libtpu: 0.0.40
codegen_flags: <defaults>
</compile_context>

<pallas_src>
import functools

import jax
import jax.numpy as jnp
from jax.experimental import pallas as pl
from jax.experimental.pallas import tpu as pltpu


_SMALL_BYTES = 512 * 1024           # below this, skip Pallas entirely
_TARGET_TILE_BYTES = 2 * 1024 * 1024  # per-buffer tile size target


def _final_layer_kernel(x_ref, o_ref, *, norm, bias):
    # Elementwise affine on the VPU. Compute in f32, store in I/O dtype.
    x = x_ref[...].astype(jnp.float32)
    o_ref[...] = (x / norm + bias).astype(o_ref.dtype)


def _choose_lane(m):
    # Largest lane width (multiple of 128) that divides m; 128 otherwise
    # (that case needs padding).
    for lane in (1024, 512, 256, 128):
        if m % lane == 0:
            return lane
    return 128


def final_layer(in_tensor, norm=1, bias=-5, *, force_pallas=False):
    """Pallas implementation of FinalLayer.forward.

    Args:
      in_tensor: float array of shape (N, C, 1, 1, ...) or (N, C). All dims
        past the first two must be size 1 (matches torch .view(*shape[:2])).
      norm: inverse temperature T^{-1} (must be nonzero).
      bias: constant logit shift.
      force_pallas: force the Pallas path even for tiny inputs (testing).
    Returns:
      (N, C) array: in_tensor.reshape(N, C) / norm + bias
    """
    assert norm != 0, "Norm 0 is not supported (matches PyTorch assert)."
    n, c = in_tensor.shape[:2]
    trailing = 1
    for d in in_tensor.shape[2:]:
        trailing *= d
    assert trailing == 1, "FinalLayer expects trailing dims of size 1."
    assert jnp.issubdtype(jnp.dtype(in_tensor.dtype), jnp.floating), (
        "FinalLayer Pallas kernel supports floating dtypes only."
    )

    x2d = in_tensor.reshape(n, c)  # pure view
    itemsize = jnp.dtype(x2d.dtype).itemsize
    m = n * c
    norm_f = float(norm)
    bias_f = float(bias)

    # -------- small-input fast path: launch overhead >> work --------
    if not force_pallas and m * itemsize < _SMALL_BYTES:
        return (x2d.astype(jnp.float32) / norm_f + bias_f).astype(x2d.dtype)

    # -------- Pallas path: lane-dense slab + tiled, pipelined grid --------
    lane = _choose_lane(m)
    flat = x2d.reshape(m)          # contiguous reshape, free
    pad = (-m) % lane
    if pad:
        # Rare misaligned case; costs one extra copy of the array.
        flat = jnp.pad(flat, (0, pad))
    rows = (m + pad) // lane
    xr = flat.reshape(rows, lane)

    # Row tile: multiple of 8 sublanes, each buffer <= ~2 MiB.
    tr = max(8, (_TARGET_TILE_BYTES // (lane * itemsize)) // 8 * 8)
    if rows <= tr:
        tr = rows                  # full-extent block (allowed even if not %8)
    grid = (pl.cdiv(rows, tr),)

    kernel = functools.partial(_final_layer_kernel, norm=norm_f, bias=bias_f)

    out = pl.pallas_call(
        kernel,
        out_shape=jax.ShapeDtypeStruct((rows, lane), x2d.dtype),
        grid=grid,
        in_specs=[pl.BlockSpec((tr, lane), lambda i: (i, 0))],
        out_specs=pl.BlockSpec((tr, lane), lambda i: (i, 0)),
        compiler_params=pltpu.CompilerParams(
            dimension_semantics=("parallel",),
        ),
    )(xr)

    out_flat = out.reshape(rows * lane)
    if pad:
        out_flat = out_flat[:m]
    return out_flat.reshape(n, c)


if __name__ == "__main__":
    root = jax.random.PRNGKey(0)
    k0, k1, k2, k3 = jax.random.split(root, 4)
    norm, bias = 2.0, -5.0

    # 1) Typical tiny classifier-head input (N, C, 1, 1) -> fast path.
    x_small = jax.random.normal(k0, (2, 4, 1, 1), dtype=jnp.float32)
    out_small = jax.block_until_ready(final_layer(x_small, norm, bias))
    ref_small = x_small.reshape(2, 4) / norm + bias
    assert out_small.shape == (2, 4)
    assert jnp.allclose(out_small, ref_small, atol=1e-6, rtol=1e-6)

    # 2) Exercise the Pallas path (lane-aligned, single block).
    x_p = jax.random.normal(k1, (16, 512, 1, 1), dtype=jnp.float32)
    out_p = jax.block_until_ready(final_layer(x_p, norm, bias, force_pallas=True))
    ref_p = x_p.reshape(16, 512) / norm + bias
    assert out_p.shape == (16, 512)
    assert jnp.allclose(out_p, ref_p, atol=1e-5, rtol=1e-5)

    # 3) Pallas path with a misaligned channel count (padding path).
    x_m = jax.random.normal(k2, (3, 100, 1, 1), dtype=jnp.float32)
    out_m = jax.block_until_ready(final_layer(x_m, norm, bias, force_pallas=True))
    ref_m = x_m.reshape(3, 100) / norm + bias
    assert out_m.shape == (3, 100)
    assert jnp.allclose(out_m, ref_m, atol=1e-5, rtol=1e-5)

    # 4) bf16 end-to-end (math in f32 inside the kernel, bf16 on HBM).
    x_b = jax.random.normal(k3, (8, 384, 1, 1), dtype=jnp.bfloat16)
    out_b = jax.block_until_ready(final_layer(x_b, norm, bias, force_pallas=True))
    ref_b = (x_b.reshape(8, 384).astype(jnp.float32) / norm + bias).astype(jnp.bfloat16)
    assert out_b.dtype == jnp.bfloat16
    assert jnp.allclose(out_b.astype(jnp.float32), ref_b.astype(jnp.float32),
                        atol=1e-2, rtol=1e-2)

    print("KERNEL_OK")
</pallas_src>

<mosaic_0001>
module attributes {stable_mosaic.version = 11 : i64} {
  func.func @_final_layer_kernel(%arg0: i32, %arg1: memref<8x1024xf32, #tpu.memory_space<vmem>>, %arg2: memref<8x1024xf32, #tpu.memory_space<vmem>>) attributes {dimension_semantics = [#tpu.dimension_semantics<parallel>], iteration_bounds = array<i64: 1>, scalar_prefetch = 0 : i64, scratch_operands = 0 : i64, tpu.core_type = #tpu.core_type<tc>, window_params = [{transform_indices = @transform_0, window_bounds = array<i64: 8, 1024>}, {transform_indices = @transform_1, window_bounds = array<i64: 8, 1024>}]} {
    %c0 = arith.constant 0 : index
    %c0_0 = arith.constant 0 : index
    %0 = vector.load %arg1[%c0, %c0_0] : memref<8x1024xf32, #tpu.memory_space<vmem>>, vector<8x1024xf32>
    %cst = arith.constant 2.000000e+00 : f32
    %1 = vector.broadcast %cst : f32 to vector<8x1024xf32>
    %2 = arith.divf %0, %1 : vector<8x1024xf32>
    %cst_1 = arith.constant -5.000000e+00 : f32
    %3 = vector.broadcast %cst_1 : f32 to vector<8x1024xf32>
    %4 = arith.addf %2, %3 : vector<8x1024xf32>
    %c0_2 = arith.constant 0 : index
    %c0_3 = arith.constant 0 : index
    %5 = vector.load %arg2[%c0_2, %c0_3] : memref<8x1024xf32, #tpu.memory_space<vmem>>, vector<8x1024xf32>
    tpu.vector_store %arg2[%c0_2, %c0_3], %4 {strides = array<i32>} : memref<8x1024xf32, #tpu.memory_space<vmem>>, vector<8x1024xf32>,
    return
  }
  func.func @transform_0(%arg0: i32) -> (i32, i32) {
    %c0_i32 = arith.constant 0 : i32
    %c0_i32_0 = arith.constant 0 : i32
    return %arg0, %c0_i32 : i32, i32
  }
  func.func @transform_1(%arg0: i32) -> (i32, i32) {
    %c0_i32 = arith.constant 0 : i32
    %c0_i32_0 = arith.constant 0 : i32
    return %arg0, %c0_i32 : i32, i32
  }
}

</mosaic_0001>

<llo_original>
// kernel: tpu_custom_call.1
$region0: #{tpu_custom_call.1}
  #allocation0 [shape = 'u32[]', space=smem, size = 0x4, offset = 0x4, fixed_abs, tag = 'smem constant byte address 0x4 - core index']
  #allocation1 [shape = 'u32[72,128]{1,0:T(1,128)}', space=vmem, size = 0x9000, scoped, tag = 'internal scratch']
  %s0 = inlined_call_operand.hbm [shape: f32[8,1024], index: 0, kind: input, shape index: {}]
  %s1 = inlined_call_operand.hbm [shape: f32[8,1024], index: 1, kind: output, shape index: {}]
  %s2 = sld [smem:[#allocation0]]
  $region18: #{tpu_custom_call.1} parent=0
    _
  %s4 = ssub.s32 1, %s2
  %s5 = scalar_select 0, %s4, %s2
  $region1: #{tpu_custom_call.1} parent=0
    #allocation2 [shape = 'u8[32768]{0}', space=vmem, size = 0x8000, scoped, tag = 'input window, operand 0, single buffered']
    #allocation3 [shape = 's32[1]{0}', space=sflag, size = 0x4, scoped, tag = 'scoped memory for tpu_custom_call.1']
    #allocation4 [shape = 's32[1]{0}', space=sflag, size = 0x4, scoped, tag = 'scoped memory for tpu_custom_call.1']
    #allocation5 [shape = 'u8[32768]{0}', space=vmem, size = 0x8000, scoped, tag = 'output window, operand 0, single buffered']
    %6 = vsyncpa [#allocation3], 0
    %7 = vsyncpa [#allocation4], 0
    // Predicated region
    $region2: #{tpu_custom_call.1} parent=1 // pred_check
      _
    $region3: #{tpu_custom_call.1} parent=1 // pred_check_branch
      %9 = sbr.rel (0) target = $region5
    $region4: #{tpu_custom_call.1} parent=1 // pred_region
      %11 = vsyncadd [#allocation3], 0
      %s13 = sshll.u32 %s0, 4
      %s14 = int_to_ptr.hbm [resolvable:$true] %s13
      %s15 = sshll.u32 [#allocation2], 4
      %s16 = int_to_ptr.vmem [resolvable:$true] %s15
      %18 = dma.hbm_to_vmem [thread:$0]  %s14, 1024, %s16, [#allocation3]
    $region5: #{tpu_custom_call.1} parent=1 // pred_fallthru
      _
    // Predicated region
    $region6: #{tpu_custom_call.1} parent=1 // pred_check
      _
    $region7: #{tpu_custom_call.1} parent=1 // pred_check_branch
      %20 = sbr.rel (0) target = $region9
    $region8: #{tpu_custom_call.1} parent=1 // pred_region
      %22 = dma.done [#allocation3], 1024
    $region9: #{tpu_custom_call.1} parent=1 // pred_fallthru
      _
    %v23 = vld [vmem:[#allocation2] sm:$0xff]
    %v24 = vld [vmem:[#allocation2 + $0x8] sm:$0xff]
    %v25 = vld [vmem:[#allocation2 + $0x10] sm:$0xff]
    %v26 = vld [vmem:[#allocation2 + $0x18] sm:$0xff]
    %v27 = vld [vmem:[#allocation2 + $0x20] sm:$0xff]
    %v28 = vld [vmem:[#allocation2 + $0x28] sm:$0xff]
    %v29 = vld [vmem:[#allocation2 + $0x30] sm:$0xff]
    %v30 = vld [vmem:[#allocation2 + $0x38] sm:$0xff]
    %v31 = vrcp.pop 2.0
    %v32 = vmul.f32 2.0, %v31
    %v33 = vsub.f32 1.0, %v32
    %v34 = vmul.f32 %v31, %v33
    %v35 = vadd.f32 %v31, %v34
    %vm36 = vweird.f32 %v31
    %v37 = vsel %vm36, %v31, %v35
    %v38 = vmul.f32 %v23, %v37
    %v39 = vmul.f32 %v24, %v37
    %v40 = vmul.f32 %v25, %v37
    %v41 = vmul.f32 %v26, %v37
    %v42 = vmul.f32 %v27, %v37
    %v43 = vmul.f32 %v28, %v37
    %v44 = vmul.f32 %v29, %v37
    %v45 = vmul.f32 %v30, %v37
    %v46 = vadd.f32 %v38, -5.0
    %v47 = vadd.f32 %v39, -5.0
    %v48 = vadd.f32 %v40, -5.0
    %v49 = vadd.f32 %v41, -5.0
    %v50 = vadd.f32 %v42, -5.0
    %v51 = vadd.f32 %v43, -5.0
    %v52 = vadd.f32 %v44, -5.0
    %v53 = vadd.f32 %v45, -5.0
    %54 = vst [vmem:[#allocation5] sm:$0xff] %v46
    %55 = vst [vmem:[#allocation5 + $0x8] sm:$0xff] %v47
    %56 = vst [vmem:[#allocation5 + $0x10] sm:$0xff] %v48
    %57 = vst [vmem:[#allocation5 + $0x18] sm:$0xff] %v49
    %58 = vst [vmem:[#allocation5 + $0x20] sm:$0xff] %v50
    %59 = vst [vmem:[#allocation5 + $0x28] sm:$0xff] %v51
    %60 = vst [vmem:[#allocation5 + $0x30] sm:$0xff] %v52
    %61 = vst [vmem:[#allocation5 + $0x38] sm:$0xff] %v53
    // Predicated region
    $region10: #{tpu_custom_call.1} parent=1 // pred_check
      _
    $region11: #{tpu_custom_call.1} parent=1 // pred_check_branch
      %63 = sbr.rel (0) target = $region13
    $region12: #{tpu_custom_call.1} parent=1 // pred_region
      %65 = vsyncadd [#allocation4], 0
      %s67 = sshll.u32 [#allocation5], 4
      %s68 = int_to_ptr.vmem [resolvable:$true] %s67
      %s69 = sshll.u32 %s1, 4
      %s70 = int_to_ptr.hbm [resolvable:$true] %s69
      %72 = dma.vmem_to_hbm [thread:$0]  %s68, 1024, %s70, [#allocation4]
    $region13: #{tpu_custom_call.1} parent=1 // pred_fallthru
      _
    // Predicated region
    $region14: #{tpu_custom_call.1} parent=1 // pred_check
      _
    $region15: #{tpu_custom_call.1} parent=1 // pred_check_branch
      %74 = sbr.rel (0) target = $region17
    $region16: #{tpu_custom_call.1} parent=1 // pred_region
      %76 = dma.done [#allocation4], 1024
    $region17: #{tpu_custom_call.1} parent=1 // pred_fallthru
      _
    %77 = vsyncpa [#allocation3], 1
    %78 = vsyncpa [#allocation4], 1

</llo_original>
